<compile_context>
chip_gen: v7x
topology: tpu7x:2x2x1
jax: 0.10.0
libtpu: 0.0.40
codegen_flags: <defaults>
</compile_context>

<pallas_src>
import jax
import jax.numpy as jnp
from jax.experimental import pallas as pl
from jax.experimental.pallas import tpu as pltpu


def ddpm_forward_kernel(x0_ref, noise_ref, scal_ref, temb_ref, w1_ref, w2_ref,
                        loss_ref):
    # scal_ref (SMEM, shape (2*B+2,)):
    #   [0:B]       sqrt_alphas_cumprod[t]            per batch
    #   [B:2B]      sqrt_one_minus_alphas_cumprod[t]  per batch
    #   [2B:2B+2]   b2 (output bias, 2 channels)
    x0 = x0_ref[...]          # (B, S, D) f32
    noise = noise_ref[...]    # (B, S, D) f32
    B, S, D = x0.shape
    H = w1_ref.shape[1]
    BS = B * S

    # mask = ones_like(x_0); mask[:, 2, :] = 0  ->  zero noise at sequence idx 2
    seq_ids = jax.lax.broadcasted_iota(jnp.int32, (B, S, D), 1)
    masked_noise = jnp.where(seq_ids == 2, 0.0, noise)

    # Per-batch diffusion coefficients, broadcast from SMEM scalars (no padded
    # VMEM tiles for tiny (B,1,1) arrays).
    bidx = jax.lax.broadcasted_iota(jnp.int32, (B, S, D), 0)
    sac = jnp.full((B, S, D), scal_ref[B - 1], jnp.float32)
    som = jnp.full((B, S, D), scal_ref[2 * B - 1], jnp.float32)
    for b in range(B - 1):                      # static, tiny unroll (B=2 -> 1 iter)
        sel = bidx == b
        sac = jnp.where(sel, scal_ref[b], sac)
        som = jnp.where(sel, scal_ref[B + b], som)

    # forward diffusion: x_t = sqrt(acp_t) * x_0 + sqrt(1 - acp_t) * masked_noise
    x_t = sac * x0 + som * masked_noise                      # (B, S, D)

    # Inner noise-prediction model, flattened to 2-D so each layer is ONE MXU push.
    x2 = x_t.reshape(BS, D)
    h = jnp.dot(x2, w1_ref[...], preferred_element_type=jnp.float32)   # (BS, H)
    # temb already has b1 folded in (done in the wrapper: time_emb[t] + b1).
    h = h.reshape(B, S, H) + temb_ref[...][:, None, :]
    h = jnp.maximum(h, 0.0).reshape(BS, H)

    pred = jnp.dot(h, w2_ref[...], preferred_element_type=jnp.float32)  # (BS, 2)
    lane2 = jax.lax.broadcasted_iota(jnp.int32, (BS, 2), 1)
    pred = pred + jnp.where(lane2 == 0, scal_ref[2 * B], scal_ref[2 * B + 1])

    # masked MSE over first two channels at rows where x_0[..., :2] != 0
    x0_2 = x0[:, :, :2].reshape(BS, 2)
    mn_2 = masked_noise[:, :, :2].reshape(BS, 2)
    data_mask = jnp.any(x0_2 != 0.0, axis=-1, keepdims=True)            # (BS, 1)
    diff = mn_2 - pred
    sq = jnp.where(data_mask, diff * diff, 0.0)
    cnt = 2.0 * jnp.sum(jnp.where(data_mask, 1.0, 0.0))
    loss_ref[0, 0] = jnp.sum(sq) / jnp.maximum(cnt, 1.0)


def point_cloud_ddpm_forward(x0, t, noise, params, schedule):
    B, S, D = x0.shape
    H = params["w1"].shape[1]

    # Glue (cheap XLA gathers / adds): per-batch schedule coefficients,
    # time-embedding rows with b1 folded in, b2 packed alongside the scalars.
    sac = schedule["sqrt_alphas_cumprod"][t]              # (B,)
    som = schedule["sqrt_one_minus_alphas_cumprod"][t]    # (B,)
    scal = jnp.concatenate(
        [sac, som, params["b2"].reshape(-1)]).astype(jnp.float32)      # (2B+2,)
    temb = (params["time_emb"][t] + params["b1"].reshape(1, H)).astype(jnp.float32)

    vmem = pl.BlockSpec(memory_space=pltpu.MemorySpace.VMEM)
    smem = pl.BlockSpec(memory_space=pltpu.MemorySpace.SMEM)

    flops = 2 * B * S * D * H + 2 * B * S * H * 2
    bytes_accessed = 4 * (x0.size + noise.size + scal.size + temb.size
                          + params["w1"].size + params["w2"].size + 1)

    loss = pl.pallas_call(
        ddpm_forward_kernel,
        out_shape=jax.ShapeDtypeStruct((1, 1), jnp.float32),
        in_specs=[vmem, vmem, smem, vmem, vmem, vmem],
        out_specs=smem,
        cost_estimate=pl.CostEstimate(flops=flops, transcendentals=0,
                                      bytes_accessed=bytes_accessed),
    )(x0, noise, scal, temb, params["w1"], params["w2"])
    return loss[0, 0]


def reference_forward(x0, t, noise, params, schedule):
    """Pure-JAX reference of the same forward pass."""
    B, S, D = x0.shape
    sac = schedule["sqrt_alphas_cumprod"][t].reshape(B, 1, 1)
    som = schedule["sqrt_one_minus_alphas_cumprod"][t].reshape(B, 1, 1)
    mask = jnp.ones_like(x0).at[:, 2, :].set(0.0)
    masked_noise = noise * mask
    x_t = sac * x0 + som * masked_noise

    h = jnp.einsum("bsd,dh->bsh", x_t, params["w1"],
                   precision=jax.lax.Precision.HIGHEST)
    h = h + params["b1"][None] + params["time_emb"][t][:, None, :]
    h = jnp.maximum(h, 0.0)
    pred = jnp.einsum("bsh,ho->bso", h, params["w2"],
                      precision=jax.lax.Precision.HIGHEST) + params["b2"][None]

    data_mask = jnp.any(x0[:, :, :2] != 0.0, axis=-1, keepdims=True)  # (B,S,1)
    diff = masked_noise[:, :, :2] - pred
    sq = jnp.where(data_mask, diff * diff, 0.0)
    cnt = 2.0 * jnp.sum(jnp.where(data_mask, 1.0, 0.0))
    return jnp.sum(sq) / jnp.maximum(cnt, 1.0)


if __name__ == "__main__":
    # small, forward-consistent shapes
    B, S, D, H = 2, 16, 4, 32
    n_steps = 16
    beta_start, beta_end = 1e-4, 2e-2

    # diffusion schedule (matches the __init__ buffers that forward() uses)
    betas = jnp.linspace(beta_start, beta_end, n_steps, dtype=jnp.float32)
    alphas = 1.0 - betas
    alphas_cumprod = jnp.cumprod(alphas)
    schedule = {
        "sqrt_alphas_cumprod": jnp.sqrt(alphas_cumprod),
        "sqrt_one_minus_alphas_cumprod": jnp.sqrt(1.0 - alphas_cumprod),
    }

    # deterministic inputs and inner-model parameters
    key = jax.random.PRNGKey(0)
    k_x, k_n, k_t, k_w1, k_e, k_w2 = jax.random.split(key, 6)
    x0 = jax.random.normal(k_x, (B, S, D), dtype=jnp.float32)
    noise = jax.random.normal(k_n, (B, S, D), dtype=jnp.float32)  # randn_like(x_0)
    t = jax.random.randint(k_t, (B,), 0, n_steps, dtype=jnp.int32)

    params = {
        "w1": 0.1 * jax.random.normal(k_w1, (D, H), dtype=jnp.float32),
        "b1": jnp.zeros((1, H), dtype=jnp.float32),
        "time_emb": 0.1 * jax.random.normal(k_e, (n_steps, H), dtype=jnp.float32),
        "w2": 0.1 * jax.random.normal(k_w2, (H, 2), dtype=jnp.float32),
        "b2": jnp.zeros((1, 2), dtype=jnp.float32),
    }

    loss = point_cloud_ddpm_forward(x0, t, noise, params, schedule)
    loss = jax.block_until_ready(loss)

    ref = jax.block_until_ready(reference_forward(x0, t, noise, params, schedule))
    assert jnp.isfinite(loss), "loss is not finite"
    assert jnp.allclose(loss, ref, rtol=1e-2, atol=1e-3), (loss, ref)

    # TODO(synk): pack_padded_sequence / lengths-based path has no Pallas
    # equivalent (ragged RNN packing); only the lengths=None path is implemented.
    print("KERNEL_OK")
</pallas_src>

<mosaic_0001>
module attributes {stable_mosaic.version = 11 : i64} {
  func.func @ddpm_forward_kernel(%arg0: memref<2x16x4xf32, #tpu.memory_space<vmem>>, %arg1: memref<2x16x4xf32, #tpu.memory_space<vmem>>, %arg2: memref<6xf32, #tpu.memory_space<smem>>, %arg3: memref<2x32xf32, #tpu.memory_space<vmem>>, %arg4: memref<4x32xf32, #tpu.memory_space<vmem>>, %arg5: memref<32x2xf32, #tpu.memory_space<vmem>>, %arg6: memref<1x1xf32, #tpu.memory_space<smem>>) attributes {dimension_semantics = [], scalar_prefetch = 0 : i64, scratch_operands = 0 : i64, tpu.core_type = #tpu.core_type<tc>} {
    %c0 = arith.constant 0 : index
    %c0_0 = arith.constant 0 : index
    %c0_1 = arith.constant 0 : index
    %0 = vector.load %arg0[%c0, %c0_0, %c0_1] : memref<2x16x4xf32, #tpu.memory_space<vmem>>, vector<2x16x4xf32>
    %c0_2 = arith.constant 0 : index
    %c0_3 = arith.constant 0 : index
    %c0_4 = arith.constant 0 : index
    %1 = vector.load %arg1[%c0_2, %c0_3, %c0_4] : memref<2x16x4xf32, #tpu.memory_space<vmem>>, vector<2x16x4xf32>
    %2 = tpu.iota {dimensions = array<i32: 1>} : vector<2x16x4xi32>
    %c2_i32 = arith.constant 2 : i32
    %3 = vector.broadcast %c2_i32 : i32 to vector<2x16x4xi32>
    %4 = arith.cmpi eq, %2, %3 : vector<2x16x4xi32>
    %cst = arith.constant 0.000000e+00 : f32
    %5 = vector.broadcast %cst : f32 to vector<2x16x4xf32>
    %6 = arith.select %4, %5, %1 : vector<2x16x4xi1>, vector<2x16x4xf32>
    %7 = tpu.iota {dimensions = array<i32: 0>} : vector<2x16x4xi32>
    %c1 = arith.constant 1 : index
    %8 = memref.load %arg2[%c1] : memref<6xf32, #tpu.memory_space<smem>>
    %9 = vector.broadcast %8 : f32 to vector<2x16x4xf32>
    %c3 = arith.constant 3 : index
    %10 = memref.load %arg2[%c3] : memref<6xf32, #tpu.memory_space<smem>>
    %11 = vector.broadcast %10 : f32 to vector<2x16x4xf32>
    %c0_i32 = arith.constant 0 : i32
    %12 = vector.broadcast %c0_i32 : i32 to vector<2x16x4xi32>
    %13 = arith.cmpi eq, %7, %12 : vector<2x16x4xi32>
    %c0_5 = arith.constant 0 : index
    %14 = memref.load %arg2[%c0_5] : memref<6xf32, #tpu.memory_space<smem>>
    %15 = vector.broadcast %14 : f32 to vector<2x16x4xf32>
    %16 = arith.select %13, %15, %9 : vector<2x16x4xi1>, vector<2x16x4xf32>
    %c2 = arith.constant 2 : index
    %17 = memref.load %arg2[%c2] : memref<6xf32, #tpu.memory_space<smem>>
    %18 = vector.broadcast %17 : f32 to vector<2x16x4xf32>
    %19 = arith.select %13, %18, %11 : vector<2x16x4xi1>, vector<2x16x4xf32>
    %20 = arith.mulf %16, %0 : vector<2x16x4xf32>
    %21 = arith.mulf %19, %6 : vector<2x16x4xf32>
    %22 = arith.addf %20, %21 : vector<2x16x4xf32>
    %23 = vector.shape_cast %22 : vector<2x16x4xf32> to vector<32x4xf32>
    %c0_6 = arith.constant 0 : index
    %c0_7 = arith.constant 0 : index
    %24 = vector.load %arg4[%c0_6, %c0_7] : memref<4x32xf32, #tpu.memory_space<vmem>>, vector<4x32xf32>
    %cst_8 = arith.constant dense<0.000000e+00> : vector<32x32xf32>
    %25 = tpu.matmul %23, %24, %cst_8 {dimension_numbers = #tpu.dot_dimension_numbers<[1], [0], [0], [1], [0, 0, 1, 1], [], []>} : vector<32x4xf32>, vector<4x32xf32>, vector<32x32xf32> -> vector<32x32xf32>
    %26 = vector.shape_cast %25 : vector<32x32xf32> to vector<2x16x32xf32>
    %c0_9 = arith.constant 0 : index
    %c0_10 = arith.constant 0 : index
    %27 = vector.load %arg3[%c0_9, %c0_10] : memref<2x32xf32, #tpu.memory_space<vmem>>, vector<2x32xf32>
    %28 = vector.shape_cast %27 : vector<2x32xf32> to vector<2x1x32xf32>
    %29 = vector.broadcast %28 : vector<2x1x32xf32> to vector<2x16x32xf32>
    %30 = arith.addf %26, %29 : vector<2x16x32xf32>
    %cst_11 = arith.constant 0.000000e+00 : f32
    %31 = vector.broadcast %cst_11 : f32 to vector<2x16x32xf32>
    %32 = arith.maximumf %30, %31 : vector<2x16x32xf32>
    %33 = vector.shape_cast %32 : vector<2x16x32xf32> to vector<32x32xf32>
    %c0_12 = arith.constant 0 : index
    %c0_13 = arith.constant 0 : index
    %34 = vector.load %arg5[%c0_12, %c0_13] : memref<32x2xf32, #tpu.memory_space<vmem>>, vector<32x2xf32>
    %cst_14 = arith.constant dense<0.000000e+00> : vector<32x2xf32>
    %35 = tpu.matmul %33, %34, %cst_14 {dimension_numbers = #tpu.dot_dimension_numbers<[1], [0], [0], [1], [0, 0, 1, 1], [], []>} : vector<32x32xf32>, vector<32x2xf32>, vector<32x2xf32> -> vector<32x2xf32>
    %36 = tpu.iota {dimensions = array<i32: 1>} : vector<32x2xi32>
    %c0_i32_15 = arith.constant 0 : i32
    %37 = vector.broadcast %c0_i32_15 : i32 to vector<32x2xi32>
    %38 = arith.cmpi eq, %36, %37 : vector<32x2xi32>
    %c4 = arith.constant 4 : index
    %39 = memref.load %arg2[%c4] : memref<6xf32, #tpu.memory_space<smem>>
    %c5 = arith.constant 5 : index
    %40 = memref.load %arg2[%c5] : memref<6xf32, #tpu.memory_space<smem>>
    %41 = vector.broadcast %39 : f32 to vector<32x2xf32>
    %42 = vector.broadcast %40 : f32 to vector<32x2xf32>
    %43 = arith.select %38, %41, %42 : vector<32x2xi1>, vector<32x2xf32>
    %44 = arith.addf %35, %43 : vector<32x2xf32>
    %45 = vector.extract_strided_slice %0 {offsets = [0, 0, 0], sizes = [2, 16, 2], strides = [1, 1, 1]} : vector<2x16x4xf32> to vector<2x16x2xf32>
    %46 = vector.shape_cast %45 : vector<2x16x2xf32> to vector<32x2xf32>
    %47 = vector.extract_strided_slice %6 {offsets = [0, 0, 0], sizes = [2, 16, 2], strides = [1, 1, 1]} : vector<2x16x4xf32> to vector<2x16x2xf32>
    %48 = vector.shape_cast %47 : vector<2x16x2xf32> to vector<32x2xf32>
    %cst_16 = arith.constant 0.000000e+00 : f32
    %49 = vector.broadcast %cst_16 : f32 to vector<32x2xf32>
    %50 = arith.cmpf one, %46, %49 : vector<32x2xf32>
    %cst_17 = arith.constant 1.000000e+00 : f32
    %cst_18 = arith.constant 0.000000e+00 : f32
    %51 = vector.broadcast %cst_17 : f32 to vector<32x2xf32>
    %52 = vector.broadcast %cst_18 : f32 to vector<32x2xf32>
    %53 = arith.select %50, %51, %52 : vector<32x2xi1>, vector<32x2xf32>
    %cst_19 = arith.constant dense<0xFF800000> : vector<32xf32>
    %54 = vector.multi_reduction <maximumf>, %53, %cst_19 [1] : vector<32x2xf32> to vector<32xf32>
    %cst_20 = arith.constant 0.000000e+00 : f32
    %55 = vector.broadcast %cst_20 : f32 to vector<32xf32>
    %56 = arith.cmpf ogt, %54, %55 : vector<32xf32>
    %57 = vector.shape_cast %56 : vector<32xi1> to vector<32x1xi1>
    %58 = arith.subf %48, %44 : vector<32x2xf32>
    %59 = arith.mulf %58, %58 : vector<32x2xf32>
    %cst_21 = arith.constant 0.000000e+00 : f32
    %60 = vector.shape_cast %57 : vector<32x1xi1> to vector<32x1xi1>
    %61 = vector.broadcast %60 : vector<32x1xi1> to vector<32x2xi1>
    %62 = vector.broadcast %cst_21 : f32 to vector<32x2xf32>
    %63 = arith.select %61, %59, %62 : vector<32x2xi1>, vector<32x2xf32>
    %cst_22 = arith.constant 1.000000e+00 : f32
    %cst_23 = arith.constant 0.000000e+00 : f32
    %64 = vector.broadcast %cst_22 : f32 to vector<32x1xf32>
    %65 = vector.broadcast %cst_23 : f32 to vector<32x1xf32>
    %66 = arith.select %57, %64, %65 : vector<32x1xi1>, vector<32x1xf32>
    %67 = vector.shape_cast %66 : vector<32x1xf32> to vector<1x32x1xf32>
    %cst_24 = arith.constant dense<0.000000e+00> : vector<1xf32>
    %68 = vector.multi_reduction <add>, %67, %cst_24 [1, 2] : vector<1x32x1xf32> to vector<1xf32>
    %69 = vector.shape_cast %68 : vector<1xf32> to vector<1x1x1xf32>
    %70 = vector.extract %69[0, 0, 0] : f32 from vector<1x1x1xf32>
    %cst_25 = arith.constant 2.000000e+00 : f32
    %71 = arith.mulf %cst_25, %70 : f32
    %72 = vector.shape_cast %63 : vector<32x2xf32> to vector<1x32x2xf32>
    %cst_26 = arith.constant dense<0.000000e+00> : vector<1xf32>
    %73 = vector.multi_reduction <add>, %72, %cst_26 [1, 2] : vector<1x32x2xf32> to vector<1xf32>
    %74 = vector.shape_cast %73 : vector<1xf32> to vector<1x1x1xf32>
    %75 = vector.extract %74[0, 0, 0] : f32 from vector<1x1x1xf32>
    %cst_27 = arith.constant 1.000000e+00 : f32
    %76 = arith.maximumf %71, %cst_27 : f32
    %77 = arith.divf %75, %76 : f32
    %c0_28 = arith.constant 0 : index
    %c0_29 = arith.constant 0 : index
    %78 = memref.load %arg6[%c0_28, %c0_29] : memref<1x1xf32, #tpu.memory_space<smem>>
    memref.store %77, %arg6[%c0_28, %c0_29] : memref<1x1xf32, #tpu.memory_space<smem>>
    return
  }
}

</mosaic_0001>

<llo_original>
// kernel: tpu_custom_call.1
$region0: #{tpu_custom_call.1}
  #allocation0 [shape = 'u32[]', space=smem, size = 0x4, offset = 0x4, fixed_abs, tag = 'smem constant byte address 0x4 - core index']
  #allocation1 [shape = 'u32[144,128]{1,0:T(1,128)}', space=vmem, size = 0x12000, scoped, tag = 'internal scratch']
  %s0 = inlined_call_operand.vmem [shape: f32[2,16,4], index: 0, kind: input, shape index: {}]
  %s1 = inlined_call_operand.vmem [shape: f32[2,16,4], index: 1, kind: input, shape index: {}]
  %s2 = inlined_call_operand.vmem [shape: f32[6], index: 2, kind: input, shape index: {}]
  %s3 = inlined_call_operand.vmem [shape: f32[2,32], index: 3, kind: input, shape index: {}]
  %s4 = inlined_call_operand.vmem [shape: f32[4,32], index: 4, kind: input, shape index: {}]
  %s5 = inlined_call_operand.vmem [shape: f32[32,2], index: 5, kind: input, shape index: {}]
  %s6 = inlined_call_operand.hbm [shape: f32[1,1], index: 6, kind: output, shape index: {}]
  %s7 = sld [smem:[#allocation0]]
  $region38: #{tpu_custom_call.1} parent=0
    _
  %s9 = ssub.s32 1, %s7
  %s10 = scalar_select 0, %s9, %s7
  $region1: #{tpu_custom_call.1} parent=0
    #allocation2 [shape = 'u8[512]{0}', space=smem, size = 0x200, scoped, tag = 'input window, operand 2, single buffered']
    #allocation3 [shape = 's32[1]{0}', space=sflag, size = 0x4, scoped, tag = 'scoped memory for tpu_custom_call.1']
    #allocation4 [shape = 's32[1]{0}', space=sflag, size = 0x4, scoped, tag = 'scoped memory for tpu_custom_call.1']
    #allocation5 [shape = 'u8[512]{0}', space=smem, size = 0x200, scoped, tag = 'output window, operand 0, single buffered']
    %11 = vsyncpa [#allocation4], 0
    %12 = vsyncpa [#allocation3], 0
    // Predicated region
    $region2: #{tpu_custom_call.1} parent=1 // pred_check
      _
    $region3: #{tpu_custom_call.1} parent=1 // pred_check_branch
      %14 = sbr.rel (0) target = $region5
    $region4: #{tpu_custom_call.1} parent=1 // pred_region
      _
    $region5: #{tpu_custom_call.1} parent=1 // pred_fallthru
      _
    // Predicated region
    $region6: #{tpu_custom_call.1} parent=1 // pred_check
      _
    $region7: #{tpu_custom_call.1} parent=1 // pred_check_branch
      %16 = sbr.rel (0) target = $region9
    $region8: #{tpu_custom_call.1} parent=1 // pred_region
      _
    $region9: #{tpu_custom_call.1} parent=1 // pred_fallthru
      _
    // Predicated region
    $region10: #{tpu_custom_call.1} parent=1 // pred_check
      _
    $region11: #{tpu_custom_call.1} parent=1 // pred_check_branch
      %18 = sbr.rel (0) target = $region13
    $region12: #{tpu_custom_call.1} parent=1 // pred_region
      %s20 = ssub.s32 16, 16
      %21 = vsyncadd [#allocation4], %s20
      %s23 = sshll.u32 %s2, 4
      %s24 = int_to_ptr.vmem [resolvable:$true] %s23
      %26 = dma.vmem_to_smem %s24, 16, [#allocation2], [#allocation4]
    $region13: #{tpu_custom_call.1} parent=1 // pred_fallthru
      _
    // Predicated region
    $region14: #{tpu_custom_call.1} parent=1 // pred_check
      _
    $region15: #{tpu_custom_call.1} parent=1 // pred_check_branch
      %28 = sbr.rel (0) target = $region17
    $region16: #{tpu_custom_call.1} parent=1 // pred_region
      _
    $region17: #{tpu_custom_call.1} parent=1 // pred_fallthru
      _
    // Predicated region
    $region18: #{tpu_custom_call.1} parent=1 // pred_check
      _
    $region19: #{tpu_custom_call.1} parent=1 // pred_check_branch
      %30 = sbr.rel (0) target = $region21
    $region20: #{tpu_custom_call.1} parent=1 // pred_region
      _
    $region21: #{tpu_custom_call.1} parent=1 // pred_fallthru
      _
    // Predicated region
    $region22: #{tpu_custom_call.1} parent=1 // pred_check
      _
    $region23: #{tpu_custom_call.1} parent=1 // pred_check_branch
      %32 = sbr.rel (0) target = $region25
    $region24: #{tpu_custom_call.1} parent=1 // pred_region
      _
    $region25: #{tpu_custom_call.1} parent=1 // pred_fallthru
      _
    // Predicated region
    $region26: #{tpu_custom_call.1} parent=1 // pred_check
      _
    $region27: #{tpu_custom_call.1} parent=1 // pred_check_branch
      %34 = sbr.rel (0) target = $region29
    $region28: #{tpu_custom_call.1} parent=1 // pred_region
      %35 = dma.done [#allocation4], 16
    $region29: #{tpu_custom_call.1} parent=1 // pred_fallthru
      _
    %36 = sfence
    %v37 = vld [vmem:[%s0] sm:$0xff]
    %v38 = vld [vmem:[%s0 + $0x8] sm:$0xff]
    %v39 = vld [vmem:[%s0 + $0x10] sm:$0xff]
    %v40 = vld [vmem:[%s0 + $0x18] sm:$0xff]
    %v41 = vld [vmem:[%s1] sm:$0xff]
    %v42 = vld [vmem:[%s1 + $0x8] sm:$0xff]
    %v43 = vld [vmem:[%s1 + $0x10] sm:$0xff]
    %v44 = vld [vmem:[%s1 + $0x18] sm:$0xff]
    %v45 = vlaneseq
    %v46 = vshrl.u32 %v45, 7
    %v47 = vadd.s32 %v46, 8
    %vm48 = vcmp.eq.s32.totalorder %v46, 2
    %vm49 = vcmp.eq.s32.totalorder %v47, 2
    %v50 = vsel %vm48, 0.0, %v41
    %v51 = vsel %vm49, 0.0, %v42
    %v52 = vsel %vm48, 0.0, %v43
    %v53 = vsel %vm49, 0.0, %v44
    %s54 = sld [smem:[#allocation2 + $0x1]]
    %v55 = vstv %s54
    %s56 = sld [smem:[#allocation2 + $0x3]]
    %v57 = vstv %s56
    %s58 = sld [smem:[#allocation2]]
    %v59 = vstv %s58
    %s60 = sld [smem:[#allocation2 + $0x2]]
    %v61 = vstv %s60
    %v62 = vmul.f32 %v59, %v37
    %v63 = vmul.f32 %v59, %v38
    %v64 = vmul.f32 %v55, %v39
    %v65 = vmul.f32 %v55, %v40
    %v66 = vmul.f32 %v61, %v50
    %v67 = vmul.f32 %v61, %v51
    %v68 = vmul.f32 %v57, %v52
    %v69 = vmul.f32 %v57, %v53
    %v70 = vadd.f32 %v62, %v66
    %v71 = vadd.f32 %v63, %v67
    %v72 = vadd.f32 %v64, %v68
    %v73 = vadd.f32 %v65, %v69
    %v74 = vld [vmem:[%s4] sm:$0xf]
    %vm75 = vcmask 31744
    %v77 = vsel %vm75, %v70, 0
    %v80 = vsel %vm75, %v71, 0
    %v83 = vsel %vm75, %v72, 0
    %v86 = vsel %vm75, %v73, 0
    %vm88 = vcmask 1043456
    %v90 = vsel %vm88, %v74, 0
    %92 = vmatprep.subr.mxu0 0.0
    %93 = vmatpush1.msra.mxu0 %v90
    %94 = vmatprep.subr.mxu0 0.0
    %95 = vmatpush1.msra.mxu0 0.0
    %96 = vmatprep.subr.mxu0 0.0
    %97 = vmatpush1.msra.mxu0 0.0
    %98 = vmatprep.subr.mxu0 0.0
    %99 = vmatpush1.msra.mxu0 0.0
    %100 = vmatprep.subr.mxu0 0.0
    %101 = vmatpush1.msra.mxu0 0.0
    %102 = vmatprep.subr.mxu0 0.0
    %103 = vmatpush1.msra.mxu0 0.0
    %104 = vmatprep.subr.mxu0 0.0
    %105 = vmatpush1.msra.mxu0 0.0
    %106 = vmatprep.subr.mxu0 0.0
    %107 = vmatpush1.msra.mxu0 0.0
    %108 = vmatprep.subr.mxu0 0.0
    %109 = vmatpush1.msra.mxu0 0.0
    %110 = vmatprep.subr.mxu0 0.0
    %111 = vmatpush1.msra.mxu0 0.0
    %112 = vmatprep.subr.mxu0 0.0
    %113 = vmatpush1.msra.mxu0 0.0
    %114 = vmatprep.subr.mxu0 0.0
    %115 = vmatpush1.msra.mxu0 0.0
    %116 = vmatprep.subr.mxu0 0.0
    %117 = vmatpush1.msra.mxu0 0.0
    %118 = vmatprep.subr.mxu0 0.0
    %119 = vmatpush1.msra.mxu0 0.0
    %120 = vmatprep.subr.mxu0 0.0
    %121 = vmatpush1.msra.mxu0 0.0
    %122 = vmatprep.subr.mxu0 0.0
    %123 = vmatpush1.msra.mxu0 0.0
    %124 = vmatprep.subr.mxu0 0.0
    %125 = vmatpush1.msra.mxu0 0.0
    %126 = vmatprep.subr.mxu0 0.0
    %127 = vmatpush1.msra.mxu0 0.0
    %128 = vmatprep.subr.mxu0 0.0
    %129 = vmatpush1.msra.mxu0 0.0
    %130 = vmatprep.subr.mxu0 0.0
    %131 = vmatpush1.msra.mxu0 0.0
    %132 = vmatprep.subr.mxu0 0.0
    %133 = vmatpush1.msra.mxu0 0.0
    %134 = vmatprep.subr.mxu0 0.0
    %135 = vmatpush1.msra.mxu0 0.0
    %136 = vmatprep.subr.mxu0 0.0
    %137 = vmatpush1.msra.mxu0 0.0
    %138 = vmatprep.subr.mxu0 0.0
    %139 = vmatpush1.msra.mxu0 0.0
    %140 = vmatprep.subr.mxu0 0.0
    %141 = vmatpush1.msra.mxu0 0.0
    %142 = vmatprep.subr.mxu0 0.0
    %143 = vmatpush1.msra.mxu0 0.0
    %144 = vmatprep.subr.mxu0 0.0
    %145 = vmatpush1.msra.mxu0 0.0
    %146 = vmatprep.subr.mxu0 0.0
    %147 = vmatpush1.msra.mxu0 0.0
    %148 = vmatprep.subr.mxu0 0.0
    %149 = vmatpush1.msra.mxu0 0.0
    %150 = vmatprep.subr.mxu0 0.0
    %151 = vmatpush1.msra.mxu0 0.0
    %152 = vmatprep.subr.mxu0 0.0
    %153 = vmatpush1.msra.mxu0 0.0
    %154 = vmatprep.subr.mxu0 0.0
    %155 = vmatpush1.msra.mxu0 0.0
    %156 = vmatprep.mubr.f32.mxu0 0.0
    %157 = vmatmul.mubr.f32.gmra.mrb[0].mxu0 %v77
    %v158 = vpop.f32.mrb[0].mxu0
    %v159 = vadd.f32 0.0, %v158
    %v160 = vpop.f32.mrb[0].mxu0
    %161 = vmatprep.mubr.f32.mxu0 0.0
    %162 = vmatmul.mubr.f32.gmra.mrb[0].mxu0 %v80
    %v163 = vpop.f32.mrb[0].mxu0
    %v164 = vadd.f32 0.0, %v163
    %v165 = vpop.f32.mrb[0].mxu0
    %166 = vmatprep.mubr.f32.mxu0 0.0
    %167 = vmatmul.mubr.f32.gmra.mrb[0].mxu0 %v83
    %v168 = vpop.f32.mrb[0].mxu0
    %v169 = vadd.f32 0.0, %v168
    %v170 = vpop.f32.mrb[0].mxu0
    %171 = vmatprep.mubr.f32.mxu0 0.0
    %172 = vmatmul.mubr.f32.gmra.mrb[0].mxu0 %v86
    %v173 = vpop.f32.mrb[0].mxu0
    %v174 = vadd.f32 0.0, %v173
    %v175 = vpop.f32.mrb[0].mxu0
    %176 = vdwg.mxu0
    %v177 = vld [vmem:[%s3] sm:$0x3]
    %v180 = vunpack.c.l.s4 1966171168
    %v181 = vunpack.c.0.s8 %v180
    %v182 = vlaneseq
    %v183 = vshrl.u32 %v182, 7
    %v184 = vsub.s32 %v181, %v183
    %v185 = vrot.slane %v177, %v184
    %v186 = vcombine.high %v185, %v185
    %v188 = vunpack.c.l.s4 1966171168
    %v189 = vunpack.c.0.s8 %v188
    %v190 = vlaneseq
    %v191 = vshrl.u32 %v190, 7
    %v192 = vsub.s32 %v189, %v191
    %v193 = vrot.slane %v185, %v192
    %v195 = vunpack.c.l.s4 1966171168
    %v196 = vunpack.c.0.s8 %v195
    %v197 = vlaneseq
    %v198 = vshrl.u32 %v197, 7
    %v199 = vsub.s32 %v196, %v198
    %v200 = vrot.slane %v186, %v199
    %v201 = vlaneseq
    %v202 = vshrl.u32 %v201, 7
    %v203 = vsub.s32 0, %v202
    %v204 = vrot.slane %v193, %v203
    %v205 = vlaneseq
    %v206 = vshrl.u32 %v205, 7
    %v207 = vsub.s32 0, %v206
    %v208 = vrot.slane %v200, %v207
    %v211 = vadd.f32 %v159, %v204
    %v212 = vadd.f32 %v164, %v204
    %v213 = vadd.f32 %v169, %v208
    %v214 = vadd.f32 %v174, %v208
    %v215 = vmax.f32 %v211, 0.0
    %v216 = vmax.f32 %v212, 0.0
    %v217 = vmax.f32 %v213, 0.0
    %v218 = vmax.f32 %v214, 0.0
    %v219 = vld [vmem:[%s5] sm:$0xff]
    %v220 = vld [vmem:[%s5 + $0x8] sm:$0xff]
    %v221 = vld [vmem:[%s5 + $0x10] sm:$0xff]
    %v222 = vld [vmem:[%s5 + $0x18] sm:$0xff]
    %v223 = vlaneseq
    %v224 = vand.u32 %v223, 127
    %vm225 = vcmp.eq.s32.totalorder %v224, 0
    %s226 = sld [smem:[#allocation2 + $0x4]]
    %s227 = sld [smem:[#allocation2 + $0x5]]
    %v228 = vstv %s226
    %v229 = vstv %s227
    %v230 = vsel %vm225, %v228, %v229
    %vm231 = vcmask 261120
    %v233 = vsel %vm231, %v215, 0
    %v236 = vsel %vm231, %v216, 0
    %v239 = vsel %vm231, %v217, 0
    %v242 = vsel %vm231, %v218, 0
    %244 = vmatprep.subr.mxu0 0.0
    %245 = vmatpush1.msra.mxu0 %v219
    %246 = vmatprep.subr.mxu0 0.0
    %247 = vmatpush1.msra.mxu0 %v220
    %248 = vmatprep.subr.mxu0 0.0
    %249 = vmatpush1.msra.mxu0 %v221
    %250 = vmatprep.subr.mxu0 0.0
    %251 = vmatpush1.msra.mxu0 %v222
    %252 = vmatprep.subr.mxu0 0.0
    %253 = vmatpush1.msra.mxu0 0.0
    %254 = vmatprep.subr.mxu0 0.0
    %255 = vmatpush1.msra.mxu0 0.0
    %256 = vmatprep.subr.mxu0 0.0
    %257 = vmatpush1.msra.mxu0 0.0
    %258 = vmatprep.subr.mxu0 0.0
    %259 = vmatpush1.msra.mxu0 0.0
    %260 = vmatprep.subr.mxu0 0.0
    %261 = vmatpush1.msra.mxu0 0.0
    %262 = vmatprep.subr.mxu0 0.0
    %263 = vmatpush1.msra.mxu0 0.0
    %264 = vmatprep.subr.mxu0 0.0
    %265 = vmatpush1.msra.mxu0 0.0
    %266 = vmatprep.subr.mxu0 0.0
    %267 = vmatpush1.msra.mxu0 0.0
    %268 = vmatprep.subr.mxu0 0.0
    %269 = vmatpush1.msra.mxu0 0.0
    %270 = vmatprep.subr.mxu0 0.0
    %271 = vmatpush1.msra.mxu0 0.0
    %272 = vmatprep.subr.mxu0 0.0
    %273 = vmatpush1.msra.mxu0 0.0
    %274 = vmatprep.subr.mxu0 0.0
    %275 = vmatpush1.msra.mxu0 0.0
    %276 = vmatprep.subr.mxu0 0.0
    %277 = vmatpush1.msra.mxu0 0.0
    %278 = vmatprep.subr.mxu0 0.0
    %279 = vmatpush1.msra.mxu0 0.0
    %280 = vmatprep.subr.mxu0 0.0
    %281 = vmatpush1.msra.mxu0 0.0
    %282 = vmatprep.subr.mxu0 0.0
    %283 = vmatpush1.msra.mxu0 0.0
    %284 = vmatprep.subr.mxu0 0.0
    %285 = vmatpush1.msra.mxu0 0.0
    %286 = vmatprep.subr.mxu0 0.0
    %287 = vmatpush1.msra.mxu0 0.0
    %288 = vmatprep.subr.mxu0 0.0
    %289 = vmatpush1.msra.mxu0 0.0
    %290 = vmatprep.subr.mxu0 0.0
    %291 = vmatpush1.msra.mxu0 0.0
    %292 = vmatprep.subr.mxu0 0.0
    %293 = vmatpush1.msra.mxu0 0.0
    %294 = vmatprep.subr.mxu0 0.0
    %295 = vmatpush1.msra.mxu0 0.0
    %296 = vmatprep.subr.mxu0 0.0
    %297 = vmatpush1.msra.mxu0 0.0
    %298 = vmatprep.subr.mxu0 0.0
    %299 = vmatpush1.msra.mxu0 0.0
    %300 = vmatprep.subr.mxu0 0.0
    %301 = vmatpush1.msra.mxu0 0.0
    %302 = vmatprep.subr.mxu0 0.0
    %303 = vmatpush1.msra.mxu0 0.0
    %304 = vmatprep.subr.mxu0 0.0
    %305 = vmatpush1.msra.mxu0 0.0
    %306 = vmatprep.subr.mxu0 0.0
    %307 = vmatpush1.msra.mxu0 0.0
    %308 = vmatprep.mubr.f32.mxu0 0.0
    %309 = vmatmul.mubr.f32.gmra.mrb[0].mxu0 %v233
    %v310 = vpop.f32.mrb[0].mxu0
    %v311 = vadd.f32 %v230, %v310
    %v312 = vpop.f32.mrb[0].mxu0
    %313 = vmatprep.mubr.f32.mxu0 0.0
    %314 = vmatmul.mubr.f32.gmra.mrb[0].mxu0 %v236
    %v315 = vpop.f32.mrb[0].mxu0
    %v316 = vadd.f32 %v230, %v315
    %v317 = vpop.f32.mrb[0].mxu0
    %318 = vmatprep.mubr.f32.mxu0 0.0
    %319 = vmatmul.mubr.f32.gmra.mrb[0].mxu0 %v239
    %v320 = vpop.f32.mrb[0].mxu0
    %v321 = vadd.f32 %v230, %v320
    %v322 = vpop.f32.mrb[0].mxu0
    %323 = vmatprep.mubr.f32.mxu0 0.0
    %324 = vmatmul.mubr.f32.gmra.mrb[0].mxu0 %v242
    %v325 = vpop.f32.mrb[0].mxu0
    %v326 = vadd.f32 %v230, %v325
    %v327 = vpop.f32.mrb[0].mxu0
    %328 = vdwg.mxu0
    %vm329 = vcmp.ne.f32.partialorder %v37, 0.0
    %vm330 = vcmp.ne.f32.partialorder %v38, 0.0
    %vm331 = vcmp.ne.f32.partialorder %v39, 0.0
    %vm332 = vcmp.ne.f32.partialorder %v40, 0.0
    %v333 = vsel %vm329, 1.0, 0.0
    %v334 = vsel %vm330, 1.0, 0.0
    %v335 = vsel %vm331, 1.0, 0.0
    %v336 = vsel %vm332, 1.0, 0.0
    %vm337 = vcmask 15360
    %v338 = vsel %vm337, %v333, -inf
    %339 = vmax.xlane.f32.xlu0 %v338
    %v340 = vpop.xlane.xlu0 %339
    %v341 = vsel %vm337, %v334, -inf
    %342 = vmax.xlane.f32.xlu0 %v341
    %v343 = vpop.xlane.xlu0 %342
    %v344 = vsel %vm337, %v335, -inf
    %345 = vmax.xlane.f32.xlu0 %v344
    %v346 = vpop.xlane.xlu0 %345
    %v347 = vsel %vm337, %v336, -inf
    %348 = vmax.xlane.f32.xlu0 %v347
    %v349 = vpop.xlane.xlu0 %348
    %vm350 = vcmp.gt.f32.partialorder %v340, 0.0
    %vm351 = vcmp.gt.f32.partialorder %v343, 0.0
    %vm352 = vcmp.gt.f32.partialorder %v346, 0.0
    %vm353 = vcmp.gt.f32.partialorder %v349, 0.0
    %v354 = vsub.f32 %v50, %v311
    %v355 = vsub.f32 %v51, %v316
    %v356 = vsub.f32 %v52, %v321
    %v357 = vsub.f32 %v53, %v326
    %v358 = vmul.f32 %v354, %v354
    %v359 = vmul.f32 %v355, %v355
    %v360 = vmul.f32 %v356, %v356
    %v361 = vmul.f32 %v357, %v357
    %v362 = vsel %vm350, 1, 0
    %v363 = vsel %vm351, 1, 0
    %v364 = vsel %vm352, 1, 0
    %v365 = vsel %vm353, 1, 0
    %vm366 = vcmp.eq.s32.totalorder %v362, 1
    %vm367 = vcmp.eq.s32.totalorder %v363, 1
    %vm368 = vcmp.eq.s32.totalorder %v364, 1
    %vm369 = vcmp.eq.s32.totalorder %v365, 1
    %v370 = vsel %vm366, %v358, 0.0
    %v371 = vsel %vm367, %v359, 0.0
    %v372 = vsel %vm368, %v360, 0.0
    %v373 = vsel %vm369, %v361, 0.0
    %v374 = vsel %vm350, 1.0, 0.0
    %v375 = vsel %vm351, 1.0, 0.0
    %v376 = vsel %vm352, 1.0, 0.0
    %v377 = vsel %vm353, 1.0, 0.0
    %vm378 = vcmask 7168
    %v379 = vsel %vm378, %v374, 0.0
    %v380 = vsel %vm378, %v375, 0.0
    %v381 = vadd.f32 %v379, %v380
    %v382 = vsel %vm378, %v376, 0.0
    %v383 = vadd.f32 %v381, %v382
    %v384 = vsel %vm378, %v377, 0.0
    %v385 = vadd.f32 %v383, %v384
    %386 = vadd.xlane.f32.xlu0 %v385
    %v387 = vpop.xlane.xlu0 %386
    %v388 = vrot.slane %v387, 4
    %v389 = vadd.f32 %v387, %v388
    %v390 = vrot.slane %v389, 2
    %v391 = vadd.f32 %v389, %v390
    %v392 = vrot.slane %v391, 1
    %v393 = vadd.f32 %v391, %v392
    %s394 = vtos %v393
    %s395 = smul.f32 %s394, 2.0
    %v396 = vsel %vm337, %v370, 0.0
    %v397 = vsel %vm337, %v371, 0.0
    %v398 = vadd.f32 %v396, %v397
    %v399 = vsel %vm337, %v372, 0.0
    %v400 = vadd.f32 %v398, %v399
    %v401 = vsel %vm337, %v373, 0.0
    %v402 = vadd.f32 %v400, %v401
    %403 = vadd.xlane.f32.xlu0 %v402
    %v404 = vpop.xlane.xlu0 %403
    %v405 = vrot.slane %v404, 4
    %v406 = vadd.f32 %v404, %v405
    %v407 = vrot.slane %v406, 2
    %v408 = vadd.f32 %v406, %v407
    %v409 = vrot.slane %v408, 1
    %v410 = vadd.f32 %v408, %v409
    %s411 = vtos %v410
    %s412 = smax.f32 %s395, 1.0
    %v413 = vstv %s412
    %v414 = vrcp.pop %v413
    %s415 = vtos %v414
    %s416 = smul.f32 %s411, %s415
    %s417 = scalar_lea.smem [#allocation5], 0
    %418 = sst [smem:[%s417]] %s416
    // Predicated region
    $region30: #{tpu_custom_call.1} parent=1 // pred_check
      _
    $region31: #{tpu_custom_call.1} parent=1 // pred_check_branch
      %420 = sbr.rel (0) target = $region33
    $region32: #{tpu_custom_call.1} parent=1 // pred_region
      %s422 = ssub.s32 16, 16
      %423 = vsyncadd [#allocation3], %s422
      %426 = dma.smem_to_hbm [#allocation5], 16, %s6, [#allocation3]
    $region33: #{tpu_custom_call.1} parent=1 // pred_fallthru
      _
    // Predicated region
    $region34: #{tpu_custom_call.1} parent=1 // pred_check
      _
    $region35: #{tpu_custom_call.1} parent=1 // pred_check_branch
      %428 = sbr.rel (0) target = $region37
    $region36: #{tpu_custom_call.1} parent=1 // pred_region
      %429 = dma.done [#allocation3], 16
    $region37: #{tpu_custom_call.1} parent=1 // pred_fallthru
      _
    %430 = sfence
    %431 = vsyncpa [#allocation3], 1
    %432 = vsyncpa [#allocation4], 1

</llo_original>
